<compile_context>
chip_gen: v7x
topology: tpu7x:2x2x1
jax: 0.10.0
libtpu: 0.0.40
codegen_flags: <defaults>
</compile_context>

<pallas_src>
import jax
import jax.numpy as jnp
from jax.experimental import pallas as pl
from jax.experimental.pallas import tpu as pltpu


# ----------------------------------------------------------------- helpers

def _pick_tile(n, candidates):
    for t in candidates:
        if n >= t and n % t == 0:
            return t
    return n


# ------------------------------------------------------------- gate kernel

def _gate_kernel(x_ref, wg_ref, s_ref):
    # scores = softmax(x @ Wg, axis=-1), computed/stored in f32
    s = jnp.dot(x_ref[...], wg_ref[...], preferred_element_type=jnp.float32)
    s = s - jnp.max(s, axis=-1, keepdims=True)
    e = jnp.exp(s)
    s_ref[...] = e * pl.reciprocal(jnp.sum(e, axis=-1, keepdims=True), approx=True)


def gate_scores(x_bf16, wg_t_bf16):
    n, c = x_bf16.shape
    e = wg_t_bf16.shape[1]
    tn = _pick_tile(n, (256, 128))
    return pl.pallas_call(
        _gate_kernel,
        out_shape=jax.ShapeDtypeStruct((n, e), jnp.float32),
        grid=(n // tn,),
        in_specs=[
            pl.BlockSpec((tn, c), lambda i: (i, 0)),
            pl.BlockSpec((c, e), lambda i: (0, 0)),
        ],
        out_specs=pl.BlockSpec((tn, e), lambda i: (i, 0)),
        compiler_params=pltpu.CompilerParams(
            dimension_semantics=("parallel",),
            vmem_limit_bytes=32 * 1024 * 1024,
        ),
    )(x_bf16, wg_t_bf16)


# ------------------------------------------------------ fused expert kernel

def _moe_kernel(x_ref, w1_ref, b1_ref, w2_ref, b2_ref, g_ref, o_ref):
    e = pl.program_id(1)          # expert index (E == shared expert)
    f = pl.program_id(2)          # hidden-dim tile index

    @pl.when((e == 0) & (f == 0))
    def _init():
        o_ref[...] = jnp.zeros_like(o_ref)

    x = x_ref[...]                                             # (tn, C) bf16
    w1 = w1_ref[0]                                             # (C, tf) bf16
    h = jnp.dot(x, w1, preferred_element_type=jnp.float32) + b1_ref[0]
    h = h * jax.nn.sigmoid(h)                                  # SiLU (f32)
    y = jnp.dot(h.astype(w2_ref.dtype), w2_ref[0],
                preferred_element_type=jnp.float32)            # (tn, C) f32
    # add c_proj bias only once per expert (first hidden tile)
    bias2 = jnp.where(f == 0, b2_ref[0], jnp.zeros_like(b2_ref[0]))
    g = g_ref[0]                                               # (tn, 1) f32 gate
    o_ref[...] += g * (y + bias2)


def moe_experts(x_bf16, w1t, b1, w2t, b2, gates):
    # x_bf16 : (N, C) bf16
    # w1t    : (E+1, C, F) bf16   (pre-transposed c_fc weights, F = 2C)
    # b1     : (E+1, 1, F) f32
    # w2t    : (E+1, F, C) bf16   (pre-transposed c_proj weights)
    # b2     : (E+1, 1, C) f32
    # gates  : (E+1, N, 1) f32    (per-token gate weight, 1.0 for shared expert)
    n, c = x_bf16.shape
    e1, _, f = w1t.shape
    tn = _pick_tile(n, (256, 128))
    tf = _pick_tile(f, (512, 256, 128))
    grid = (n // tn, e1, f // tf)
    return pl.pallas_call(
        _moe_kernel,
        out_shape=jax.ShapeDtypeStruct((n, c), jnp.float32),
        grid=grid,
        in_specs=[
            pl.BlockSpec((tn, c), lambda i, e, k: (i, 0)),      # tokens (reused)
            pl.BlockSpec((1, c, tf), lambda i, e, k: (e, 0, k)),  # W1^T tile
            pl.BlockSpec((1, 1, tf), lambda i, e, k: (e, 0, k)),  # b1 tile
            pl.BlockSpec((1, tf, c), lambda i, e, k: (e, k, 0)),  # W2^T tile
            pl.BlockSpec((1, 1, c), lambda i, e, k: (e, 0, 0)),   # b2
            pl.BlockSpec((1, tn, 1), lambda i, e, k: (e, i, 0)),  # gate column
        ],
        out_specs=pl.BlockSpec((tn, c), lambda i, e, k: (i, 0)),
        compiler_params=pltpu.CompilerParams(
            dimension_semantics=("parallel", "arbitrary", "arbitrary"),
            vmem_limit_bytes=32 * 1024 * 1024,
        ),
    )(x_bf16, w1t, b1, w2t, b2, gates)


# ------------------------------------------------------------------- glue

def moe_forward(x, params, cfg):
    shape = x.shape
    c = shape[-1]
    E = cfg["n_routed_experts"]
    K = cfg["n_activated_experts"]
    alpha = cfg["load_balance_alpha"]

    xf = x.reshape(-1, c)
    n = xf.shape[0]
    x_bf = xf.astype(jnp.bfloat16)

    # ---- gate: softmax scores (Pallas), top-k routing (JAX)
    scores = gate_scores(x_bf, params["gate_w_t"])             # (N, E) f32
    biased = scores + params["gate_bias"][None, :]
    _, top_idx = jax.lax.top_k(biased, K)                      # (N, K)
    sel = jax.nn.one_hot(top_idx, E, dtype=jnp.float32).sum(axis=1)   # (N, E) 0/1
    dense_w = scores * sel                                     # gathered gate weights

    # gate matrix for the fused kernel: routed experts + shared expert (weight 1)
    gates = jnp.concatenate([dense_w, jnp.ones((n, 1), jnp.float32)], axis=1)
    gates = gates.T.reshape(E + 1, n, 1)

    # ---- fused routed experts + shared expert
    y = moe_experts(x_bf, params["w1t"], params["b1"],
                    params["w2t"], params["b2"], gates)        # (N, C) f32

    # ---- load-balance loss
    counts = sel.sum(axis=0)                                   # bincount
    f_i = counts * E / (K * n + 1e-6)
    expert_probs = scores.mean(axis=0)
    load_balance_loss = alpha * jnp.sum(f_i * expert_probs)

    return y.reshape(shape).astype(x.dtype), load_balance_loss


# --------------------------------------------------------------- param init

def init_params(key, cfg):
    C = cfg["n_embd"]
    E = cfg["n_routed_experts"]
    n_mlp = E + 1  # routed experts + shared expert
    keys = jax.random.split(key, 2 * n_mlp + 1)

    def nrm(k, shape, scale=0.02):
        return (scale * jax.random.normal(k, shape)).astype(jnp.float32)

    w1_list, w2_list = [], []
    for i in range(n_mlp):
        w1_list.append(nrm(keys[2 * i], (2 * C, C)))           # c_fc   (2C, C)
        w2_list.append(nrm(keys[2 * i + 1], (C, 2 * C)))       # c_proj (C, 2C)

    params = {
        # gate (pre-transposed to (C, E), bf16 for the MXU)
        "gate_w_t": nrm(keys[-1], (E, C)).T.astype(jnp.bfloat16),
        "gate_bias": jnp.zeros((E,), jnp.float32),
        # stacked, pre-transposed expert + shared weights
        "w1t": jnp.stack([w.T for w in w1_list]).astype(jnp.bfloat16),  # (E+1, C, 2C)
        "b1": jnp.zeros((n_mlp, 1, 2 * C), jnp.float32),
        "w2t": jnp.stack([w.T for w in w2_list]).astype(jnp.bfloat16),  # (E+1, 2C, C)
        "b2": jnp.zeros((n_mlp, 1, C), jnp.float32),
    }
    return params


# --------------------------------------------------------------------- main

if __name__ == "__main__":
    cfg = dict(
        n_embd=32,
        n_routed_experts=4,
        n_activated_experts=2,
        load_balance_alpha=0.01,
    )
    key = jax.random.PRNGKey(0)
    pkey, xkey = jax.random.split(key)
    params = init_params(pkey, cfg)

    B, T, C = 2, 8, cfg["n_embd"]
    x = jax.random.normal(xkey, (B, T, C), dtype=jnp.float32)

    fwd = jax.jit(lambda xx: moe_forward(xx, params, cfg))
    out, loss = fwd(x)
    jax.block_until_ready((out, loss))

    assert out.shape == (B, T, C) and out.dtype == jnp.float32
    assert loss.shape == ()
    assert bool(jnp.all(jnp.isfinite(out))) and bool(jnp.isfinite(loss))
    print("KERNEL_OK")
</pallas_src>

<mosaic_0001>
module attributes {stable_mosaic.version = 11 : i64} {
  func.func @_gate_kernel(%arg0: i32, %arg1: memref<16x32xbf16, #tpu.memory_space<vmem>>, %arg2: memref<32x4xbf16, #tpu.memory_space<vmem>>, %arg3: memref<16x4xf32, #tpu.memory_space<vmem>>) attributes {dimension_semantics = [#tpu.dimension_semantics<parallel>], iteration_bounds = array<i64: 1>, scalar_prefetch = 0 : i64, scratch_operands = 0 : i64, tpu.core_type = #tpu.core_type<tc>, window_params = [{transform_indices = @transform_0, window_bounds = array<i64: 16, 32>}, {pipeline_mode = #tpu.pipeline_mode<synchronous>, transform_indices = @transform_1, window_bounds = array<i64: 32, 4>}, {transform_indices = @transform_2, window_bounds = array<i64: 16, 4>}]} {
    %c0 = arith.constant 0 : index
    %c0_0 = arith.constant 0 : index
    %0 = vector.load %arg1[%c0, %c0_0] : memref<16x32xbf16, #tpu.memory_space<vmem>>, vector<16x32xbf16>
    %c0_1 = arith.constant 0 : index
    %c0_2 = arith.constant 0 : index
    %1 = vector.load %arg2[%c0_1, %c0_2] : memref<32x4xbf16, #tpu.memory_space<vmem>>, vector<32x4xbf16>
    %cst = arith.constant dense<0.000000e+00> : vector<16x4xf32>
    %2 = tpu.matmul %0, %1, %cst {dimension_numbers = #tpu.dot_dimension_numbers<[1], [0], [0], [1], [0, 0, 1, 1], [], []>} : vector<16x32xbf16>, vector<32x4xbf16>, vector<16x4xf32> -> vector<16x4xf32>
    %cst_3 = arith.constant dense<0xFF800000> : vector<16xf32>
    %3 = vector.multi_reduction <maximumf>, %2, %cst_3 [1] : vector<16x4xf32> to vector<16xf32>
    %4 = vector.shape_cast %3 : vector<16xf32> to vector<16x1xf32>
    %5 = vector.broadcast %4 : vector<16x1xf32> to vector<16x4xf32>
    %6 = arith.subf %2, %5 : vector<16x4xf32>
    %7 = math.exp %6 : vector<16x4xf32>
    %cst_4 = arith.constant dense<0.000000e+00> : vector<16xf32>
    %8 = vector.multi_reduction <add>, %7, %cst_4 [1] : vector<16x4xf32> to vector<16xf32>
    %9 = vector.shape_cast %8 : vector<16xf32> to vector<16x1xf32>
    %10 = tpu.reciprocal %9 {approx = true} : vector<16x1xf32> -> vector<16x1xf32>
    %11 = vector.broadcast %10 : vector<16x1xf32> to vector<16x4xf32>
    %12 = arith.mulf %7, %11 : vector<16x4xf32>
    %c0_5 = arith.constant 0 : index
    %c0_6 = arith.constant 0 : index
    %13 = vector.load %arg3[%c0_5, %c0_6] : memref<16x4xf32, #tpu.memory_space<vmem>>, vector<16x4xf32>
    tpu.vector_store %arg3[%c0_5, %c0_6], %12 {strides = array<i32>} : memref<16x4xf32, #tpu.memory_space<vmem>>, vector<16x4xf32>,
    return
  }
  func.func @transform_0(%arg0: i32) -> (i32, i32) {
    %c0_i32 = arith.constant 0 : i32
    %c0_i32_0 = arith.constant 0 : i32
    return %arg0, %c0_i32 : i32, i32
  }
  func.func @transform_1(%arg0: i32) -> (i32, i32) {
    %c0_i32 = arith.constant 0 : i32
    %c0_i32_0 = arith.constant 0 : i32
    %c0_i32_1 = arith.constant 0 : i32
    return %c0_i32, %c0_i32_0 : i32, i32
  }
  func.func @transform_2(%arg0: i32) -> (i32, i32) {
    %c0_i32 = arith.constant 0 : i32
    %c0_i32_0 = arith.constant 0 : i32
    return %arg0, %c0_i32 : i32, i32
  }
}

module attributes {stable_mosaic.version = 11 : i64} {
  func.func @_moe_kernel(%arg0: i32, %arg1: i32, %arg2: i32, %arg3: memref<16x32xbf16, #tpu.memory_space<vmem>>, %arg4: memref<1x32x64xbf16, #tpu.memory_space<vmem>>, %arg5: memref<1x1x64xf32, #tpu.memory_space<vmem>>, %arg6: memref<1x64x32xbf16, #tpu.memory_space<vmem>>, %arg7: memref<1x1x32xf32, #tpu.memory_space<vmem>>, %arg8: memref<1x16x1xf32, #tpu.memory_space<vmem>>, %arg9: memref<16x32xf32, #tpu.memory_space<vmem>>) attributes {dimension_semantics = [#tpu.dimension_semantics<parallel>, #tpu.dimension_semantics<arbitrary>, #tpu.dimension_semantics<arbitrary>], iteration_bounds = array<i64: 1, 5, 1>, scalar_prefetch = 0 : i64, scratch_operands = 0 : i64, tpu.core_type = #tpu.core_type<tc>, window_params = [{transform_indices = @transform_0, window_bounds = array<i64: 16, 32>}, {transform_indices = @transform_1, window_bounds = array<i64: 1, 32, 64>}, {transform_indices = @transform_2, window_bounds = array<i64: 1, 1, 64>}, {transform_indices = @transform_3, window_bounds = array<i64: 1, 64, 32>}, {transform_indices = @transform_4, window_bounds = array<i64: 1, 1, 32>}, {transform_indices = @transform_5, window_bounds = array<i64: 1, 16, 1>}, {transform_indices = @transform_6, window_bounds = array<i64: 16, 32>}]} {
    %c0_i32 = arith.constant 0 : i32
    %0 = arith.cmpi eq, %arg1, %c0_i32 : i32
    %c0_i32_0 = arith.constant 0 : i32
    %1 = arith.cmpi eq, %arg2, %c0_i32_0 : i32
    %2 = arith.andi %0, %1 : i1
    %3 = arith.extui %2 : i1 to i32
    %c0_i32_1 = arith.constant 0 : i32
    %4 = arith.cmpi ne, %3, %c0_i32_1 : i32
    scf.if %4 {
      %cst_26 = arith.constant 0.000000e+00 : f32
      %37 = vector.broadcast %cst_26 : f32 to vector<16x32xf32>
      %c0_27 = arith.constant 0 : index
      %c0_28 = arith.constant 0 : index
      %38 = vector.load %arg9[%c0_27, %c0_28] : memref<16x32xf32, #tpu.memory_space<vmem>>, vector<16x32xf32>
      tpu.vector_store %arg9[%c0_27, %c0_28], %37 {strides = array<i32>} : memref<16x32xf32, #tpu.memory_space<vmem>>, vector<16x32xf32>,
    } else {
    }
    %c0 = arith.constant 0 : index
    %c0_2 = arith.constant 0 : index
    %5 = vector.load %arg3[%c0, %c0_2] : memref<16x32xbf16, #tpu.memory_space<vmem>>, vector<16x32xbf16>
    %c0_3 = arith.constant 0 : index
    %c0_4 = arith.constant 0 : index
    %c0_5 = arith.constant 0 : index
    %6 = vector.load %arg4[%c0_3, %c0_4, %c0_5] : memref<1x32x64xbf16, #tpu.memory_space<vmem>>, vector<1x32x64xbf16>
    %7 = vector.shape_cast %6 : vector<1x32x64xbf16> to vector<32x64xbf16>
    %cst = arith.constant dense<0.000000e+00> : vector<16x64xf32>
    %8 = tpu.matmul %5, %7, %cst {dimension_numbers = #tpu.dot_dimension_numbers<[1], [0], [0], [1], [0, 0, 1, 1], [], []>} : vector<16x32xbf16>, vector<32x64xbf16>, vector<16x64xf32> -> vector<16x64xf32>
    %c0_6 = arith.constant 0 : index
    %c0_7 = arith.constant 0 : index
    %c0_8 = arith.constant 0 : index
    %9 = vector.load %arg5[%c0_6, %c0_7, %c0_8] : memref<1x1x64xf32, #tpu.memory_space<vmem>>, vector<1x1x64xf32>
    %10 = vector.shape_cast %9 : vector<1x1x64xf32> to vector<1x64xf32>
    %11 = vector.broadcast %10 : vector<1x64xf32> to vector<16x64xf32>
    %12 = arith.addf %8, %11 : vector<16x64xf32>
    %13 = arith.negf %12 : vector<16x64xf32>
    %14 = math.exp %13 : vector<16x64xf32>
    %cst_9 = arith.constant 1.000000e+00 : f32
    %15 = vector.broadcast %cst_9 : f32 to vector<16x64xf32>
    %16 = arith.addf %15, %14 : vector<16x64xf32>
    %17 = arith.divf %15, %16 : vector<16x64xf32>
    %18 = arith.mulf %12, %17 : vector<16x64xf32>
    %19 = arith.truncf %18 : vector<16x64xf32> to vector<16x64xbf16>
    %c0_10 = arith.constant 0 : index
    %c0_11 = arith.constant 0 : index
    %c0_12 = arith.constant 0 : index
    %20 = vector.load %arg6[%c0_10, %c0_11, %c0_12] : memref<1x64x32xbf16, #tpu.memory_space<vmem>>, vector<1x64x32xbf16>
    %21 = vector.shape_cast %20 : vector<1x64x32xbf16> to vector<64x32xbf16>
    %cst_13 = arith.constant dense<0.000000e+00> : vector<16x32xf32>
    %22 = tpu.matmul %19, %21, %cst_13 {dimension_numbers = #tpu.dot_dimension_numbers<[1], [0], [0], [1], [0, 0, 1, 1], [], []>} : vector<16x64xbf16>, vector<64x32xbf16>, vector<16x32xf32> -> vector<16x32xf32>
    %c0_i32_14 = arith.constant 0 : i32
    %23 = arith.cmpi eq, %arg2, %c0_i32_14 : i32
    %c0_15 = arith.constant 0 : index
    %c0_16 = arith.constant 0 : index
    %c0_17 = arith.constant 0 : index
    %24 = vector.load %arg7[%c0_15, %c0_16, %c0_17] : memref<1x1x32xf32, #tpu.memory_space<vmem>>, vector<1x1x32xf32>
    %25 = vector.shape_cast %24 : vector<1x1x32xf32> to vector<1x32xf32>
    %cst_18 = arith.constant 0.000000e+00 : f32
    %26 = vector.broadcast %cst_18 : f32 to vector<1x32xf32>
    %27 = arith.select %23, %25, %26 : vector<1x32xf32>
    %c0_19 = arith.constant 0 : index
    %c0_20 = arith.constant 0 : index
    %c0_21 = arith.constant 0 : index
    %28 = vector.load %arg8[%c0_19, %c0_20, %c0_21] : memref<1x16x1xf32, #tpu.memory_space<vmem>>, vector<1x16x1xf32>
    %29 = vector.shape_cast %28 : vector<1x16x1xf32> to vector<16x1xf32>
    %c0_22 = arith.constant 0 : index
    %c0_23 = arith.constant 0 : index
    %30 = vector.load %arg9[%c0_22, %c0_23] : memref<16x32xf32, #tpu.memory_space<vmem>>, vector<16x32xf32>
    %31 = vector.broadcast %27 : vector<1x32xf32> to vector<16x32xf32>
    %32 = arith.addf %22, %31 : vector<16x32xf32>
    %33 = vector.broadcast %29 : vector<16x1xf32> to vector<16x32xf32>
    %34 = arith.mulf %33, %32 : vector<16x32xf32>
    %35 = arith.addf %30, %34 : vector<16x32xf32>
    %c0_24 = arith.constant 0 : index
    %c0_25 = arith.constant 0 : index
    %36 = vector.load %arg9[%c0_24, %c0_25] : memref<16x32xf32, #tpu.memory_space<vmem>>, vector<16x32xf32>
    tpu.vector_store %arg9[%c0_24, %c0_25], %35 {strides = array<i32>} : memref<16x32xf32, #tpu.memory_space<vmem>>, vector<16x32xf32>,
    return
  }
  func.func @transform_0(%arg0: i32, %arg1: i32, %arg2: i32) -> (i32, i32) {
    %c0_i32 = arith.constant 0 : i32
    %c0_i32_0 = arith.constant 0 : i32
    return %arg0, %c0_i32 : i32, i32
  }
  func.func @transform_1(%arg0: i32, %arg1: i32, %arg2: i32) -> (i32, i32, i32) {
    %c0_i32 = arith.constant 0 : i32
    %c0_i32_0 = arith.constant 0 : i32
    return %arg1, %c0_i32, %arg2 : i32, i32, i32
  }
  func.func @transform_2(%arg0: i32, %arg1: i32, %arg2: i32) -> (i32, i32, i32) {
    %c0_i32 = arith.constant 0 : i32
    %c0_i32_0 = arith.constant 0 : i32
    return %arg1, %c0_i32, %arg2 : i32, i32, i32
  }
  func.func @transform_3(%arg0: i32, %arg1: i32, %arg2: i32) -> (i32, i32, i32) {
    %c0_i32 = arith.constant 0 : i32
    %c0_i32_0 = arith.constant 0 : i32
    return %arg1, %arg2, %c0_i32 : i32, i32, i32
  }
  func.func @transform_4(%arg0: i32, %arg1: i32, %arg2: i32) -> (i32, i32, i32) {
    %c0_i32 = arith.constant 0 : i32
    %c0_i32_0 = arith.constant 0 : i32
    %c0_i32_1 = arith.constant 0 : i32
    return %arg1, %c0_i32, %c0_i32_0 : i32, i32, i32
  }
  func.func @transform_5(%arg0: i32, %arg1: i32, %arg2: i32) -> (i32, i32, i32) {
    %c0_i32 = arith.constant 0 : i32
    %c0_i32_0 = arith.constant 0 : i32
    return %arg1, %arg0, %c0_i32 : i32, i32, i32
  }
  func.func @transform_6(%arg0: i32, %arg1: i32, %arg2: i32) -> (i32, i32) {
    %c0_i32 = arith.constant 0 : i32
    %c0_i32_0 = arith.constant 0 : i32
    return %arg0, %c0_i32 : i32, i32
  }
}

</mosaic_0001>

<llo_original>
// kernel: _lambda_.2
$region0: #{_lambda_.2}
  #allocation0 [shape = 'u32[]', space=smem, size = 0x4, offset = 0x4, fixed_abs, tag = 'smem constant byte address 0x4 - core index']
  #allocation1 [shape = 'u32[144,128]{1,0:T(1,128)}', space=vmem, size = 0x12000, scoped, tag = 'internal scratch']
  %s0 = inlined_call_operand.vmem [shape: bf16[16,32], index: 0, kind: input, shape index: {}]
  %s1 = inlined_call_operand.vmem [shape: bf16[32,4], index: 1, kind: input, shape index: {}]
  %s2 = inlined_call_operand.vmem [shape: f32[16,4], index: 2, kind: output, shape index: {}]
  %s3 = sld [smem:[#allocation0]]
  $region18: #{_lambda_.2} parent=0
    _
  %s5 = ssub.s32 1, %s3
  %s6 = scalar_select 0, %s5, %s3
  // Predicated region
  $region2: #{_lambda_.2} parent=0 // pred_check
    _
  $region3: #{_lambda_.2} parent=0 // pred_check_branch
    %8 = sbr.rel (0) target = $region5
  $region4: #{_lambda_.2} parent=0 // pred_region
    _
  $region5: #{_lambda_.2} parent=0 // pred_fallthru
    _
  // Predicated region
  $region6: #{_lambda_.2} parent=0 // pred_check
    _
  $region7: #{_lambda_.2} parent=0 // pred_check_branch
    %10 = sbr.rel (0) target = $region9
  $region8: #{_lambda_.2} parent=0 // pred_region
    _
  $region9: #{_lambda_.2} parent=0 // pred_fallthru
    _
  %v12 = vld [vmem:[%s0] sm:$0xf]
  %v13 = vld [vmem:[%s0 + $0x4] sm:$0xf]
  %v14 = vld [vmem:[%s1] sm:$0xf]
  %v15 = vld [vmem:[%s1 + $0x4] sm:$0xf]
  %v16 = vld [vmem:[%s1 + $0x8] sm:$0xf]
  %v17 = vld [vmem:[%s1 + $0xc] sm:$0xf]
  %v20 = vunpack.c.l.b16 %v12
  %v21 = vunpack.c.l.b16 %v13
  %v22 = vpack.c.b16 %v21, %v20
  %v27 = vunpack.c.l.b16 %v14
  %v28 = vunpack.c.l.b16 %v15
  %v29 = vunpack.c.l.b16 %v16
  %v30 = vunpack.c.l.b16 %v17
  %v31 = vpack.c.b16 %v28, %v27
  %v32 = vpack.c.b16 %v30, %v29
  %vm35 = vcmask 261120
  %v37 = vsel %vm35, %v22, 0
  %39 = vmatprep.subr.bf16.mxu0 0
  %40 = vmatpush1.bf16.msra.mxu0 %v31
  %41 = vmatprep.subr.bf16.mxu0 0
  %42 = vmatpush1.bf16.msra.mxu0 %v32
  %43 = vmatprep.subr.bf16.mxu0 0
  %44 = vmatpush1.bf16.msra.mxu0 0
  %45 = vmatprep.subr.bf16.mxu0 0
  %46 = vmatpush1.bf16.msra.mxu0 0
  %47 = vmatprep.subr.bf16.mxu0 0
  %48 = vmatpush1.bf16.msra.mxu0 0
  %49 = vmatprep.subr.bf16.mxu0 0
  %50 = vmatpush1.bf16.msra.mxu0 0
  %51 = vmatprep.subr.bf16.mxu0 0
  %52 = vmatpush1.bf16.msra.mxu0 0
  %53 = vmatprep.subr.bf16.mxu0 0
  %54 = vmatpush1.bf16.msra.mxu0 0
  %55 = vmatprep.subr.bf16.mxu0 0
  %56 = vmatpush1.bf16.msra.mxu0 0
  %57 = vmatprep.subr.bf16.mxu0 0
  %58 = vmatpush1.bf16.msra.mxu0 0
  %59 = vmatprep.subr.bf16.mxu0 0
  %60 = vmatpush1.bf16.msra.mxu0 0
  %61 = vmatprep.subr.bf16.mxu0 0
  %62 = vmatpush1.bf16.msra.mxu0 0
  %63 = vmatprep.subr.bf16.mxu0 0
  %64 = vmatpush1.bf16.msra.mxu0 0
  %65 = vmatprep.subr.bf16.mxu0 0
  %66 = vmatpush1.bf16.msra.mxu0 0
  %67 = vmatprep.subr.bf16.mxu0 0
  %68 = vmatpush1.bf16.msra.mxu0 0
  %69 = vmatprep.subr.bf16.mxu0 0
  %70 = vmatpush1.bf16.msra.mxu0 0
  %71 = vmatprep.mubr.bf16.mxu0 0
  %72 = vmatmul.mubr.bf16.gmra.mrb[0].mxu0 %v37
  %v73 = vpop.f32.mrb[0].mxu0
  %v74 = vadd.f32 0.0, %v73
  %v75 = vpop.f32.mrb[0].mxu0
  %v76 = vpop.f32.mrb[0].mxu0
  %v77 = vadd.f32 0.0, %v76
  %v78 = vpop.f32.mrb[0].mxu0
  %79 = vdwg.mxu0
  %vm80 = vcmask 31744
  %v81 = vsel %vm80, %v74, -inf
  %82 = vmax.xlane.f32.xlu0 %v81
  %v83 = vpop.xlane.xlu0 %82
  %v84 = vsel %vm80, %v77, -inf
  %85 = vmax.xlane.f32.xlu0 %v84
  %v86 = vpop.xlane.xlu0 %85
  %v87 = vsub.f32 %v74, %v83
  %v88 = vsub.f32 %v77, %v86
  %v89 = vmul.f32 %v87, 1.442695
  %v90 = vpow.pop %v89
  %v91 = vmul.f32 %v88, 1.442695
  %v92 = vpow.pop %v91
  %v93 = vsel %vm80, %v90, 0.0
  %94 = vadd.xlane.f32.xlu0 %v93
  %v95 = vpop.xlane.xlu0 %94
  %v96 = vsel %vm80, %v92, 0.0
  %97 = vadd.xlane.f32.xlu0 %v96
  %v98 = vpop.xlane.xlu0 %97
  %v99 = vrcp.pop %v95
  %v100 = vrcp.pop %v98
  %v101 = vmul.f32 %v90, %v99
  %v102 = vmul.f32 %v92, %v100
  %103 = vst.msk [vmem:[%s2] sm:$0xff] %vm80, %v101
  %104 = vst.msk [vmem:[%s2 + $0x8] sm:$0xff] %vm80, %v102
  // Predicated region
  $region10: #{_lambda_.2} parent=0 // pred_check
    _
  $region11: #{_lambda_.2} parent=0 // pred_check_branch
    %106 = sbr.rel (0) target = $region13
  $region12: #{_lambda_.2} parent=0 // pred_region
    _
  $region13: #{_lambda_.2} parent=0 // pred_fallthru
    _
  // Predicated region
  $region14: #{_lambda_.2} parent=0 // pred_check
    _
  $region15: #{_lambda_.2} parent=0 // pred_check_branch
    %108 = sbr.rel (0) target = $region17
  $region16: #{_lambda_.2} parent=0 // pred_region
    _
  $region17: #{_lambda_.2} parent=0 // pred_fallthru
    _

// kernel: _lambda_.3
$region0: #{_lambda_.3}
  #allocation0 [shape = 'u32[]', space=smem, size = 0x4, offset = 0x4, fixed_abs, tag = 'smem constant byte address 0x4 - core index']
  #allocation1 [shape = 'u32[144,128]{1,0:T(1,128)}', space=vmem, size = 0x12000, scoped, tag = 'internal scratch']
  %s0 = inlined_call_operand.vmem [shape: bf16[16,32], index: 0, kind: input, shape index: {}]
  %s1 = inlined_call_operand.vmem [shape: bf16[5,32,64], index: 1, kind: input, shape index: {}]
  %s2 = inlined_call_operand.vmem [shape: f32[5,1,64], index: 2, kind: input, shape index: {}]
  %s3 = inlined_call_operand.vmem [shape: bf16[5,64,32], index: 3, kind: input, shape index: {}]
  %s4 = inlined_call_operand.vmem [shape: f32[5,1,32], index: 4, kind: input, shape index: {}]
  %s5 = inlined_call_operand.vmem [shape: f32[5,16,1], index: 5, kind: input, shape index: {}]
  %s6 = inlined_call_operand.hbm [shape: f32[16,32], index: 6, kind: output, shape index: {}]
  %s7 = sld [smem:[#allocation0]]
  $region61: #{_lambda_.3} parent=0
    _
  %s9 = ssub.s32 1, %s7
  %s10 = scalar_select 0, %s9, %s7
  $region1: #{_lambda_.3} parent=0
    #allocation2 [shape = 'u8[8192]{0}', space=vmem, size = 0x2000, scoped, tag = 'output window, operand 0, single buffered']
    #allocation3 [shape = 's32[2]{0}', space=sflag, size = 0x8, scoped, tag = 'scoped memory for _lambda_.3']
    %11 = vsyncpa [#allocation3], 0
    loop: start=0, step=1, limit=7
    $region2: #{_lambda_.3} parent=1 // loop_pre_header
      _
    $region3: #{_lambda_.3} parent=1 // loop_header
      %s13 = sphi 0, %s17
      %p14 = scmp.ge.s32.totalorder %s13, 7
      %s20 = sphi 0, %s39
      %s21 = sphi 0, %s35
      %s22 = sphi 0, %s31
      %s23 = sphi 0, %s20
      %s24 = sphi 0, %s21
      %s25 = sphi 0, %s22
      %s26 = sphi 0, %s23
      %s27 = sphi 0, %s24
      %s28 = sphi 0, %s25
      %s42 = sphi 0, %s44
      %s45 = sphi 0, %s42
      %s46 = sphi 0, %s45
      %s62 = sphi 0, %s46
      %s70 = sphi 0, %s72
      %s73 = sphi 0, %s70
      %s74 = sphi 0, %s73
      %s90 = sphi 0, %s74
      %s98 = sphi 0, %s100
      %s101 = sphi 0, %s98
      %s102 = sphi 0, %s101
      %s118 = sphi 0, %s102
      %s126 = sphi 0, %s128
      %s129 = sphi 0, %s126
      %s130 = sphi 0, %s129
      %s146 = sphi 0, %s130
      %s152 = sphi 0, %s154
      %s155 = sphi 0, %s152
      %s156 = sphi 0, %s155
      %s172 = sphi 0, %s156
      %s180 = sphi 0, %s182
      %s183 = sphi 0, %s180
      %s184 = sphi 0, %s183
      %s200 = sphi 0, %s184
      %s206 = sphi 0, %s208
      %s209 = sphi 0, %s206
      %s210 = sphi 0, %s209
      %s226 = sphi 0, %s210
    $region4: #{_lambda_.3} parent=1 // loop_header_branch
      %16 = sbr.rel (%p14) target = $region8
    $region5: #{_lambda_.3} parent=1 // loop_body
      %s18 = ssub.s32 %s13, 1
      %s19 = ssub.s32 %s13, 2
      %s29 = sadd.s32 1, %s22
      %p30 = scmp.ge.s32.totalorder %s29, 1
      %s31 = scalar_select %p30, 0, %s29
      %s32 = sadd.s32 1, %s21
      %s33 = scalar_select %p30, %s32, %s21
      %p34 = scmp.ge.s32.totalorder %s33, 5
      %s35 = scalar_select %p34, 0, %s33
      %s36 = sadd.s32 1, %s20
      %s37 = scalar_select %p34, %s36, %s20
      %p38 = scmp.ge.s32.totalorder %s37, 1
      %s39 = scalar_select %p38, 0, %s37
      %s40 = ssub.s32 %s20, %s39
      %p41 = scmp.eq.s32.totalorder %s40, 0
      %s43 = sadd.s32 %s42, 1
      %s44 = scalar_select %p41, %s42, %s43
      %p47 = pneg %p41
      %p48 = scmp.eq.s32.totalorder %s13, 4
      %p49 = por %p47, %p48
      %p50 = scmp.ne.s32.totalorder %s42, %s45
      %p51 = scmp.eq.s32.totalorder %s13, 0
      %p52 = por %p50, %p51
      %p53 = scmp.ne.s32.totalorder %s42, %s45
      %p54 = scmp.eq.s32.totalorder %s18, 4
      %p55 = por %p53, %p54
      %p56 = scmp.ne.s32.totalorder %s45, %s46
      %p57 = scmp.eq.s32.totalorder %s18, 0
      %p58 = por %p56, %p57
      %p59 = scmp.ne.s32.totalorder %s45, %s46
      %p60 = scmp.eq.s32.totalorder %s19, 4
      %p61 = por %p59, %p60
      %p63 = scmp.ne.s32.totalorder %s46, %s62
      %p64 = scmp.eq.s32.totalorder %s19, 0
      %p65 = por %p63, %p64
      %s66 = ssub.s32 %s21, %s35
      %s67 = ssub.s32 %s22, %s31
      %s68 = sor.u32 %s66, %s67
      %p69 = scmp.eq.s32.totalorder %s68, 0
      %s71 = sadd.s32 %s70, 1
      %s72 = scalar_select %p69, %s70, %s71
      %p75 = pneg %p69
      %p76 = scmp.eq.s32.totalorder %s13, 4
      %p77 = por %p75, %p76
      %p78 = scmp.ne.s32.totalorder %s70, %s73
      %p79 = scmp.eq.s32.totalorder %s13, 0
      %p80 = por %p78, %p79
      %p81 = scmp.ne.s32.totalorder %s70, %s73
      %p82 = scmp.eq.s32.totalorder %s18, 4
      %p83 = por %p81, %p82
      %p84 = scmp.ne.s32.totalorder %s73, %s74
      %p85 = scmp.eq.s32.totalorder %s18, 0
      %p86 = por %p84, %p85
      %p87 = scmp.ne.s32.totalorder %s73, %s74
      %p88 = scmp.eq.s32.totalorder %s19, 4
      %p89 = por %p87, %p88
      %p91 = scmp.ne.s32.totalorder %s74, %s90
      %p92 = scmp.eq.s32.totalorder %s19, 0
      %p93 = por %p91, %p92
      %s94 = ssub.s32 %s21, %s35
      %s95 = ssub.s32 %s22, %s31
      %s96 = sor.u32 %s94, %s95
      %p97 = scmp.eq.s32.totalorder %s96, 0
      %s99 = sadd.s32 %s98, 1
      %s100 = scalar_select %p97, %s98, %s99
      %p103 = pneg %p97
      %p104 = scmp.eq.s32.totalorder %s13, 4
      %p105 = por %p103, %p104
      %p106 = scmp.ne.s32.totalorder %s98, %s101
      %p107 = scmp.eq.s32.totalorder %s13, 0
      %p108 = por %p106, %p107
      %p109 = scmp.ne.s32.totalorder %s98, %s101
      %p110 = scmp.eq.s32.totalorder %s18, 4
      %p111 = por %p109, %p110
      %p112 = scmp.ne.s32.totalorder %s101, %s102
      %p113 = scmp.eq.s32.totalorder %s18, 0
      %p114 = por %p112, %p113
      %p115 = scmp.ne.s32.totalorder %s101, %s102
      %p116 = scmp.eq.s32.totalorder %s19, 4
      %p117 = por %p115, %p116
      %p119 = scmp.ne.s32.totalorder %s102, %s118
      %p120 = scmp.eq.s32.totalorder %s19, 0
      %p121 = por %p119, %p120
      %s122 = ssub.s32 %s21, %s35
      %s123 = ssub.s32 %s22, %s31
      %s124 = sor.u32 %s122, %s123
      %p125 = scmp.eq.s32.totalorder %s124, 0
      %s127 = sadd.s32 %s126, 1
      %s128 = scalar_select %p125, %s126, %s127
      %p131 = pneg %p125
      %p132 = scmp.eq.s32.totalorder %s13, 4
      %p133 = por %p131, %p132
      %p134 = scmp.ne.s32.totalorder %s126, %s129
      %p135 = scmp.eq.s32.totalorder %s13, 0
      %p136 = por %p134, %p135
      %p137 = scmp.ne.s32.totalorder %s126, %s129
      %p138 = scmp.eq.s32.totalorder %s18, 4
      %p139 = por %p137, %p138
      %p140 = scmp.ne.s32.totalorder %s129, %s130
      %p141 = scmp.eq.s32.totalorder %s18, 0
      %p142 = por %p140, %p141
      %p143 = scmp.ne.s32.totalorder %s129, %s130
      %p144 = scmp.eq.s32.totalorder %s19, 4
      %p145 = por %p143, %p144
      %p147 = scmp.ne.s32.totalorder %s130, %s146
      %p148 = scmp.eq.s32.totalorder %s19, 0
      %p149 = por %p147, %p148
      %s150 = ssub.s32 %s21, %s35
      %p151 = scmp.eq.s32.totalorder %s150, 0
      %s153 = sadd.s32 %s152, 1
      %s154 = scalar_select %p151, %s152, %s153
      %p157 = pneg %p151
      %p158 = scmp.eq.s32.totalorder %s13, 4
      %p159 = por %p157, %p158
      %p160 = scmp.ne.s32.totalorder %s152, %s155
      %p161 = scmp.eq.s32.totalorder %s13, 0
      %p162 = por %p160, %p161
      %p163 = scmp.ne.s32.totalorder %s152, %s155
      %p164 = scmp.eq.s32.totalorder %s18, 4
      %p165 = por %p163, %p164
      %p166 = scmp.ne.s32.totalorder %s155, %s156
      %p167 = scmp.eq.s32.totalorder %s18, 0
      %p168 = por %p166, %p167
      %p169 = scmp.ne.s32.totalorder %s155, %s156
      %p170 = scmp.eq.s32.totalorder %s19, 4
      %p171 = por %p169, %p170
      %p173 = scmp.ne.s32.totalorder %s156, %s172
      %p174 = scmp.eq.s32.totalorder %s19, 0
      %p175 = por %p173, %p174
      %s176 = ssub.s32 %s21, %s35
      %s177 = ssub.s32 %s20, %s39
      %s178 = sor.u32 %s176, %s177
      %p179 = scmp.eq.s32.totalorder %s178, 0
      %s181 = sadd.s32 %s180, 1
      %s182 = scalar_select %p179, %s180, %s181
      %p185 = pneg %p179
      %p186 = scmp.eq.s32.totalorder %s13, 4
      %p187 = por %p185, %p186
      %p188 = scmp.ne.s32.totalorder %s180, %s183
      %p189 = scmp.eq.s32.totalorder %s13, 0
      %p190 = por %p188, %p189
      %p191 = scmp.ne.s32.totalorder %s180, %s183
      %p192 = scmp.eq.s32.totalorder %s18, 4
      %p193 = por %p191, %p192
      %p194 = scmp.ne.s32.totalorder %s183, %s184
      %p195 = scmp.eq.s32.totalorder %s18, 0
      %p196 = por %p194, %p195
      %p197 = scmp.ne.s32.totalorder %s183, %s184
      %p198 = scmp.eq.s32.totalorder %s19, 4
      %p199 = por %p197, %p198
      %p201 = scmp.ne.s32.totalorder %s184, %s200
      %p202 = scmp.eq.s32.totalorder %s19, 0
      %p203 = por %p201, %p202
      %s204 = ssub.s32 %s20, %s39
      %p205 = scmp.eq.s32.totalorder %s204, 0
      %s207 = sadd.s32 %s206, 1
      %s208 = scalar_select %p205, %s206, %s207
      %p211 = pneg %p205
      %p212 = scmp.eq.s32.totalorder %s13, 4
      %p213 = por %p211, %p212
      %p214 = scmp.ne.s32.totalorder %s206, %s209
      %p215 = scmp.eq.s32.totalorder %s13, 0
      %p216 = por %p214, %p215
      %p217 = scmp.ne.s32.totalorder %s206, %s209
      %p218 = scmp.eq.s32.totalorder %s18, 4
      %p219 = por %p217, %p218
      %p220 = scmp.ne.s32.totalorder %s209, %s210
      %p221 = scmp.eq.s32.totalorder %s18, 0
      %p222 = por %p220, %p221
      %p223 = scmp.ne.s32.totalorder %s209, %s210
      %p224 = scmp.eq.s32.totalorder %s19, 4
      %p225 = por %p223, %p224
      %p227 = scmp.ne.s32.totalorder %s210, %s226
      %p228 = scmp.eq.s32.totalorder %s19, 0
      %p229 = por %p227, %p228
      %p230 = scmp.le.s32.totalorder 1, %s13
      %p231 = scmp.lt.s32.totalorder %s13, 6
      %p232 = pnand %p230, %p231
      %p233 = pneg %p232
      // Predicated region
      $region9: #{_lambda_.3} parent=5 // pred_check
        _
      $region10: #{_lambda_.3} parent=5 // pred_check_branch
        %235 = sbr.rel (%p232) target = $region12
      $region11: #{_lambda_.3} parent=5 // pred_region
        %s236 = ssub.s32 %s13, 1
        // Predicated region
        $region13: #{_lambda_.3} parent=11 // pred_check
          %p237 = pneg %p58
        $region14: #{_lambda_.3} parent=11 // pred_check_branch
          %239 = sbr.rel (%p237) target = $region16
        $region15: #{_lambda_.3} parent=11 // pred_region
          %s240 = smul.u32 2, %s23
          %p241 = scmp.lt.s32.totalorder %s240, 1
          %s242 = scalar_select %p241, %s240, 1
          %s243 = smul.addr %s242, 4
          %s244 = scalar_lea.vmem %s0, %s243
          %s245 = smul.u32 2, %s23
        $region16: #{_lambda_.3} parent=11 // pred_fallthru
          _
      $region12: #{_lambda_.3} parent=5 // pred_fallthru
        _
      %p246 = scmp.lt.s32.totalorder %s13, 5
      // Predicated region
      $region17: #{_lambda_.3} parent=5 // pred_check
        %p247 = pneg %p246
      $region18: #{_lambda_.3} parent=5 // pred_check_branch
        %249 = sbr.rel (%p247) target = $region20
      $region19: #{_lambda_.3} parent=5 // pred_region
        // Predicated region
        $region21: #{_lambda_.3} parent=19 // pred_check
          %p250 = pneg %p80
        $region22: #{_lambda_.3} parent=19 // pred_check_branch
          %252 = sbr.rel (%p250) target = $region24
        $region23: #{_lambda_.3} parent=19 // pred_region
          %p253 = scmp.lt.s32.totalorder %s21, 4
          %s254 = scalar_select %p253, %s21, 4
          %p255 = scmp.lt.s32.totalorder %s22, 0
          %s256 = scalar_select %p255, %s22, 0
          %s257 = smul.addr %s254, 4
          %s258 = sadd.s32 %s256, %s257
          %s259 = smul.addr %s258, 4
          %s260 = scalar_lea.vmem %s1, %s259
        $region24: #{_lambda_.3} parent=19 // pred_fallthru
          _
        // Predicated region
        $region25: #{_lambda_.3} parent=19 // pred_check
          %p261 = pneg %p108
        $region26: #{_lambda_.3} parent=19 // pred_check_branch
          %263 = sbr.rel (%p261) target = $region28
        $region27: #{_lambda_.3} parent=19 // pred_region
          %p264 = scmp.lt.s32.totalorder %s21, 4
          %s265 = scalar_select %p264, %s21, 4
          %p266 = scmp.lt.s32.totalorder %s22, 0
          %s267 = scalar_select %p266, %s22, 0
          %s268 = sadd.s32 %s267, %s265
          %s269 = scalar_lea.vmem %s2, %s268
        $region28: #{_lambda_.3} parent=19 // pred_fallthru
          _
        // Predicated region
        $region29: #{_lambda_.3} parent=19 // pred_check
          %p270 = pneg %p136
        $region30: #{_lambda_.3} parent=19 // pred_check_branch
          %272 = sbr.rel (%p270) target = $region32
        $region31: #{_lambda_.3} parent=19 // pred_region
          %s273 = smul.u32 8, %s22
          %p274 = scmp.lt.s32.totalorder %s21, 4
          %s275 = scalar_select %p274, %s21, 4
          %p276 = scmp.lt.s32.totalorder %s273, 7
          %s277 = scalar_select %p276, %s273, 7
          %s278 = smul.addr %s275, 8
          %s279 = sadd.s32 %s277, %s278
          %s280 = smul.addr %s279, 4
          %s281 = scalar_lea.vmem %s3, %s280
          %s282 = smul.u32 8, %s22
        $region32: #{_lambda_.3} parent=19 // pred_fallthru
          _
        // Predicated region
        $region33: #{_lambda_.3} parent=19 // pred_check
          %p283 = pneg %p162
        $region34: #{_lambda_.3} parent=19 // pred_check_branch
          %285 = sbr.rel (%p283) target = $region36
        $region35: #{_lambda_.3} parent=19 // pred_region
          %p286 = scmp.lt.s32.totalorder %s21, 4
          %s287 = scalar_select %p286, %s21, 4
          %s288 = scalar_lea.vmem %s4, %s287
        $region36: #{_lambda_.3} parent=19 // pred_fallthru
          _
        // Predicated region
        $region37: #{_lambda_.3} parent=19 // pred_check
          %p289 = pneg %p190
        $region38: #{_lambda_.3} parent=19 // pred_check_branch
          %291 = sbr.rel (%p289) target = $region40
        $region39: #{_lambda_.3} parent=19 // pred_region
          %s292 = smul.u32 2, %s20
          %p293 = scmp.lt.s32.totalorder %s21, 4
          %s294 = scalar_select %p293, %s21, 4
          %p295 = scmp.lt.s32.totalorder %s292, 1
          %s296 = scalar_select %p295, %s292, 1
          %s297 = smul.addr %s294, 2
          %s298 = sadd.s32 %s296, %s297
          %s299 = smul.addr %s298, 8
          %s300 = scalar_lea.vmem %s5, %s299
          %s301 = smul.u32 2, %s20
        $region40: #{_lambda_.3} parent=19 // pred_fallthru
          _
      $region20: #{_lambda_.3} parent=5 // pred_fallthru
        _
      %p302 = scmp.le.s32.totalorder 1, %s13
      %p303 = scmp.lt.s32.totalorder %s13, 6
      %p304 = pnand %p302, %p303
      %p305 = pneg %p304
      // Predicated region
      $region41: #{_lambda_.3} parent=5 // pred_check
        _
      $region42: #{_lambda_.3} parent=5 // pred_check_branch
        %307 = sbr.rel (%p304) target = $region44
      $region43: #{_lambda_.3} parent=5 // pred_region
        %s308 = ssub.s32 %s13, 1
        %s309 = smul.u32 2, %s23
        %p310 = scmp.lt.s32.totalorder %s309, 1
        %s311 = scalar_select %p310, %s309, 1
        %s312 = smul.addr %s311, 4
        %s313 = scalar_lea.vmem %s0, %s312
        %p314 = pneg %p58
        %p315 = pneg %p55
        %p316 = scmp.lt.s32.totalorder %s24, 4
        %s317 = scalar_select %p316, %s24, 4
        %p318 = scmp.lt.s32.totalorder %s25, 0
        %s319 = scalar_select %p318, %s25, 0
        %s320 = smul.addr %s317, 4
        %s321 = sadd.s32 %s319, %s320
        %s322 = smul.addr %s321, 4
        %s323 = scalar_lea.vmem %s1, %s322
        %p324 = pneg %p86
        %p325 = pneg %p83
        %p326 = scmp.lt.s32.totalorder %s24, 4
        %s327 = scalar_select %p326, %s24, 4
        %p328 = scmp.lt.s32.totalorder %s25, 0
        %s329 = scalar_select %p328, %s25, 0
        %s330 = sadd.s32 %s329, %s327
        %s331 = scalar_lea.vmem %s2, %s330
        %p332 = pneg %p114
        %p333 = pneg %p111
        %s334 = smul.u32 8, %s25
        %p335 = scmp.lt.s32.totalorder %s24, 4
        %s336 = scalar_select %p335, %s24, 4
        %p337 = scmp.lt.s32.totalorder %s334, 7
        %s338 = scalar_select %p337, %s334, 7
        %s339 = smul.addr %s336, 8
        %s340 = sadd.s32 %s338, %s339
        %s341 = smul.addr %s340, 4
        %s342 = scalar_lea.vmem %s3, %s341
        %p343 = pneg %p142
        %p344 = pneg %p139
        %p345 = scmp.lt.s32.totalorder %s24, 4
        %s346 = scalar_select %p345, %s24, 4
        %s347 = scalar_lea.vmem %s4, %s346
        %p348 = pneg %p168
        %p349 = pneg %p165
        %s350 = smul.u32 2, %s23
        %p351 = scmp.lt.s32.totalorder %s24, 4
        %s352 = scalar_select %p351, %s24, 4
        %p353 = scmp.lt.s32.totalorder %s350, 1
        %s354 = scalar_select %p353, %s350, 1
        %s355 = smul.addr %s352, 2
        %s356 = sadd.s32 %s354, %s355
        %s357 = smul.addr %s356, 8
        %s358 = scalar_lea.vmem %s5, %s357
        %p359 = pneg %p196
        %p360 = pneg %p193
        %p361 = pneg %p222
        %p362 = pneg %p219
        %s363 = smul.u32 2, %s23
        %p364 = scmp.lt.s32.totalorder %s363, 1
        %s365 = scalar_select %p364, %s363, 1
        %s366 = smul.addr %s365, 4
        %s367 = scalar_lea.vmem %s0, %s366
        %s368 = smul.u32 2, %s23
        %p369 = scmp.lt.s32.totalorder %s24, 4
        %s370 = scalar_select %p369, %s24, 4
        %p371 = scmp.lt.s32.totalorder %s25, 0
        %s372 = scalar_select %p371, %s25, 0
        %s373 = smul.addr %s370, 4
        %s374 = sadd.s32 %s372, %s373
        %s375 = smul.addr %s374, 4
        %s376 = scalar_lea.vmem %s1, %s375
        %p377 = scmp.lt.s32.totalorder %s24, 4
        %s378 = scalar_select %p377, %s24, 4
        %p379 = scmp.lt.s32.totalorder %s25, 0
        %s380 = scalar_select %p379, %s25, 0
        %s381 = sadd.s32 %s380, %s378
        %s382 = scalar_lea.vmem %s2, %s381
        %s383 = smul.u32 8, %s25
        %p384 = scmp.lt.s32.totalorder %s24, 4
        %s385 = scalar_select %p384, %s24, 4
        %p386 = scmp.lt.s32.totalorder %s383, 7
        %s387 = scalar_select %p386, %s383, 7
        %s388 = smul.addr %s385, 8
        %s389 = sadd.s32 %s387, %s388
        %s390 = smul.addr %s389, 4
        %s391 = scalar_lea.vmem %s3, %s390
        %s392 = smul.u32 8, %s25
        %p393 = scmp.lt.s32.totalorder %s24, 4
        %s394 = scalar_select %p393, %s24, 4
        %s395 = scalar_lea.vmem %s4, %s394
        %s396 = smul.u32 2, %s23
        %p397 = scmp.lt.s32.totalorder %s24, 4
        %s398 = scalar_select %p397, %s24, 4
        %p399 = scmp.lt.s32.totalorder %s396, 1
        %s400 = scalar_select %p399, %s396, 1
        %s401 = smul.addr %s398, 2
        %s402 = sadd.s32 %s400, %s401
        %s403 = smul.addr %s402, 8
        %s404 = scalar_lea.vmem %s5, %s403
        %s405 = smul.u32 2, %s23
        %s406 = smul.u32 2, %s23
        %p408 = scmp.eq.s32.totalorder %s24, 0
        %p409 = scmp.eq.s32.totalorder %s25, 0
        %p410 = pnand %p408, %p409
        %p411 = pneg %p410
        // Predicated region
        $region45: #{_lambda_.3} parent=43 // pred_check
          _
        $region46: #{_lambda_.3} parent=43 // pred_check_branch
          %413 = sbr.rel (%p410) target = $region48
        $region47: #{_lambda_.3} parent=43 // pred_region
          %vm414 = vcmask 261120
          %415 = vst.msk [vmem:[#allocation2] sm:$0xff] %vm414, 0.0
          %416 = vst.msk [vmem:[#allocation2 + $0x8] sm:$0xff] %vm414, 0.0
        $region48: #{_lambda_.3} parent=43 // pred_fallthru
          _
        %v417 = vld [vmem:[%s367] sm:$0xf]
        %v418 = vld [vmem:[%s367 + $0x4] sm:$0xf]
        %v419 = vld [vmem:[%s376] sm:$0xf]
        %v420 = vld [vmem:[%s376 + $0x4] sm:$0xf]
        %v421 = vld [vmem:[%s376 + $0x8] sm:$0xf]
        %v422 = vld [vmem:[%s376 + $0xc] sm:$0xf]
        %v423 = vld [vmem:[%s382] sm:$0x1]
        %v425 = vlaneseq
        %v426 = vshrl.u32 %v425, 7
        %v427 = vsub.s32 0, %v426
        %v428 = vrot.slane %v423, %v427
        %v432 = vunpack.c.l.b16 %v417
        %v433 = vunpack.c.l.b16 %v418
        %v434 = vpack.c.b16 %v433, %v432
        %v439 = vunpack.c.l.b16 %v419
        %v440 = vunpack.c.l.b16 %v420
        %v441 = vunpack.c.l.b16 %v421
        %v442 = vunpack.c.l.b16 %v422
        %v443 = vpack.c.b16 %v440, %v439
        %v444 = vpack.c.b16 %v442, %v441
        %vm447 = vcmask 261120
        %v449 = vsel %vm447, %v434, 0
        %451 = vmatprep.subr.bf16.mxu0 0
        %452 = vmatpush1.bf16.msra.mxu0 %v443
        %453 = vmatprep.subr.bf16.mxu0 0
        %454 = vmatpush1.bf16.msra.mxu0 %v444
        %455 = vmatprep.subr.bf16.mxu0 0
        %456 = vmatpush1.bf16.msra.mxu0 0
        %457 = vmatprep.subr.bf16.mxu0 0
        %458 = vmatpush1.bf16.msra.mxu0 0
        %459 = vmatprep.subr.bf16.mxu0 0
        %460 = vmatpush1.bf16.msra.mxu0 0
        %461 = vmatprep.subr.bf16.mxu0 0
        %462 = vmatpush1.bf16.msra.mxu0 0
        %463 = vmatprep.subr.bf16.mxu0 0
        %464 = vmatpush1.bf16.msra.mxu0 0
        %465 = vmatprep.subr.bf16.mxu0 0
        %466 = vmatpush1.bf16.msra.mxu0 0
        %467 = vmatprep.subr.bf16.mxu0 0
        %468 = vmatpush1.bf16.msra.mxu0 0
        %469 = vmatprep.subr.bf16.mxu0 0
        %470 = vmatpush1.bf16.msra.mxu0 0
        %471 = vmatprep.subr.bf16.mxu0 0
        %472 = vmatpush1.bf16.msra.mxu0 0
        %473 = vmatprep.subr.bf16.mxu0 0
        %474 = vmatpush1.bf16.msra.mxu0 0
        %475 = vmatprep.subr.bf16.mxu0 0
        %476 = vmatpush1.bf16.msra.mxu0 0
        %477 = vmatprep.subr.bf16.mxu0 0
        %478 = vmatpush1.bf16.msra.mxu0 0
        %479 = vmatprep.subr.bf16.mxu0 0
        %480 = vmatpush1.bf16.msra.mxu0 0
        %481 = vmatprep.subr.bf16.mxu0 0
        %482 = vmatpush1.bf16.msra.mxu0 0
        %483 = vmatprep.mubr.bf16.mxu0 0
        %484 = vmatmul.mubr.bf16.gmra.mrb[0].mxu0 %v449
        %v485 = vpop.f32.mrb[0].mxu0
        %v486 = vadd.f32 %v428, %v485
        %v487 = vpop.f32.mrb[0].mxu0
        %v488 = vpop.f32.mrb[0].mxu0
        %v489 = vadd.f32 %v428, %v488
        %v490 = vpop.f32.mrb[0].mxu0
        %491 = vdwg.mxu0
        %v492 = vxor.u32 %v486, 2147483648
        %v493 = vxor.u32 %v489, 2147483648
        %v494 = vmul.f32 %v492, 1.442695
        %v495 = vpow.pop %v494
        %v496 = vmul.f32 %v493, 1.442695
        %v497 = vpow.pop %v496
        %v498 = vadd.f32 %v495, 1.0
        %v499 = vadd.f32 %v497, 1.0
        %v500 = vrcp.pop %v498
        %v501 = vmul.f32 1.0, %v500
        %v502 = vrcp.pop %v499
        %v503 = vmul.f32 1.0, %v502
        %v504 = vmul.f32 %v486, %v501
        %v505 = vmul.f32 %v489, %v503
        %v506 = vpack.c.bf16 %v505, %v504
        %v507 = vld [vmem:[%s391] sm:$0xf]
        %v508 = vld [vmem:[%s391 + $0x4] sm:$0xf]
        %v509 = vld [vmem:[%s391 + $0x8] sm:$0xf]
        %v510 = vld [vmem:[%s391 + $0xc] sm:$0xf]
        %v511 = vld [vmem:[%s391 + $0x10] sm:$0xf]
        %v512 = vld [vmem:[%s391 + $0x14] sm:$0xf]
        %v513 = vld [vmem:[%s391 + $0x18] sm:$0xf]
        %v514 = vld [vmem:[%s391 + $0x1c] sm:$0xf]
        %v515 = vld [vmem:[%s395] sm:$0x1]
        %s516 = scalar_select %p409, 1, 0
        %v517 = vstv %s516
        %vm518 = vcmp.eq.s32.totalorder %v517, 1
        %v519 = vsel %vm518, %v515, 0.0
        %v520 = vld [vmem:[%s404] sm:$0xff]
        %v521 = vld [vmem:[%s404 + $0x8] sm:$0xff]
        %v522 = vld [vmem:[#allocation2] sm:$0xff]
        %v523 = vld [vmem:[#allocation2 + $0x8] sm:$0xff]
        %v525 = vlaneseq
        %v526 = vshrl.u32 %v525, 7
        %v527 = vsub.s32 0, %v526
        %v528 = vrot.slane %v519, %v527
        %v538 = vunpack.c.l.b16 %v507
        %v539 = vunpack.c.l.b16 %v508
        %v540 = vunpack.c.l.b16 %v509
        %v541 = vunpack.c.l.b16 %v510
        %v542 = vunpack.c.l.b16 %v511
        %v543 = vunpack.c.l.b16 %v512
        %v544 = vunpack.c.l.b16 %v513
        %v545 = vunpack.c.l.b16 %v514
        %v546 = vpack.c.b16 %v539, %v538
        %v547 = vpack.c.b16 %v541, %v540
        %v548 = vpack.c.b16 %v543, %v542
        %v549 = vpack.c.b16 %v545, %v544
        %vm554 = vcmask 523264
        %v556 = vsel %vm554, %v506, 0
        %558 = vmatprep.subr.bf16.mxu0 0
        %559 = vmatpush1.bf16.msra.mxu0 %v546
        %560 = vmatprep.subr.bf16.mxu0 0
        %561 = vmatpush1.bf16.msra.mxu0 %v547
        %562 = vmatprep.subr.bf16.mxu0 0
        %563 = vmatpush1.bf16.msra.mxu0 %v548
        %564 = vmatprep.subr.bf16.mxu0 0
        %565 = vmatpush1.bf16.msra.mxu0 %v549
        %566 = vmatprep.subr.bf16.mxu0 0
        %567 = vmatpush1.bf16.msra.mxu0 0
        %568 = vmatprep.subr.bf16.mxu0 0
        %569 = vmatpush1.bf16.msra.mxu0 0
        %570 = vmatprep.subr.bf16.mxu0 0
        %571 = vmatpush1.bf16.msra.mxu0 0
        %572 = vmatprep.subr.bf16.mxu0 0
        %573 = vmatpush1.bf16.msra.mxu0 0
        %574 = vmatprep.subr.bf16.mxu0 0
        %575 = vmatpush1.bf16.msra.mxu0 0
        %576 = vmatprep.subr.bf16.mxu0 0
        %577 = vmatpush1.bf16.msra.mxu0 0
        %578 = vmatprep.subr.bf16.mxu0 0
        %579 = vmatpush1.bf16.msra.mxu0 0
        %580 = vmatprep.subr.bf16.mxu0 0
        %581 = vmatpush1.bf16.msra.mxu0 0
        %582 = vmatprep.subr.bf16.mxu0 0
        %583 = vmatpush1.bf16.msra.mxu0 0
        %584 = vmatprep.subr.bf16.mxu0 0
        %585 = vmatpush1.bf16.msra.mxu0 0
        %586 = vmatprep.subr.bf16.mxu0 0
        %587 = vmatpush1.bf16.msra.mxu0 0
        %588 = vmatprep.subr.bf16.mxu0 0
        %589 = vmatpush1.bf16.msra.mxu0 0
        %590 = vmatprep.mubr.bf16.mxu0 0
        %591 = vmatmul.mubr.bf16.gmra.mrb[0].mxu0 %v556
        %v592 = vpop.f32.mrb[0].mxu0
        %v593 = vadd.f32 %v528, %v592
        %v594 = vpop.f32.mrb[0].mxu0
        %v595 = vpop.f32.mrb[0].mxu0
        %v596 = vadd.f32 %v528, %v595
        %v597 = vpop.f32.mrb[0].mxu0
        %598 = vdwg.mxu0
        %600 = vset.pattern.permute.xlu0 0
        %601 = vperm.xlu0 %600, %v520
        %v602 = vpop.permute.xlu0 %601
        %605 = vset.pattern.permute.xlu0 0
        %606 = vperm.xlu0 %605, %v521
        %v607 = vpop.permute.xlu0 %606
        %v609 = vmul.f32 %v602, %v593
        %v610 = vmul.f32 %v607, %v596
        %v611 = vadd.f32 %v522, %v609
        %v612 = vadd.f32 %v523, %v610
        %613 = vst.msk [vmem:[#allocation2] sm:$0xff] %vm447, %v611
        %614 = vst.msk [vmem:[#allocation2 + $0x8] sm:$0xff] %vm447, %v612
        // Predicated region
        $region49: #{_lambda_.3} parent=43 // pred_check
          %p615 = pneg %p219
        $region50: #{_lambda_.3} parent=43 // pred_check_branch
          %617 = sbr.rel (%p615) target = $region52
        $region51: #{_lambda_.3} parent=43 // pred_region
          %s618 = smul.u32 2, %s23
          %s620 = ssub.s32 256, 256
          %621 = vsyncadd [#allocation3], %s620
          %s622 = smul.addr %s618, 128
          %s623 = scalar_lea.hbm %s6, %s622
          %s624 = sshll.u32 [#allocation2], 4
          %s625 = int_to_ptr.vmem [resolvable:$true] %s624
          %630 = dma.vmem_to_hbm [thread:$0]  %s625, 256, %s623, [#allocation3], 128, 128, 8
        $region52: #{_lambda_.3} parent=43 // pred_fallthru
          _
        // Predicated region
        $region53: #{_lambda_.3} parent=43 // pred_check
          %p631 = pneg %p219
        $region54: #{_lambda_.3} parent=43 // pred_check_branch
          %633 = sbr.rel (%p631) target = $region56
        $region55: #{_lambda_.3} parent=43 // pred_region
          %634 = dma.done [#allocation3], 256
        $region56: #{_lambda_.3} parent=43 // pred_fallthru
          _
      $region44: #{_lambda_.3} parent=5 // pred_fallthru
        _
      %p635 = scmp.le.s32.totalorder 2, %s13
      // Predicated region
      $region57: #{_lambda_.3} parent=5 // pred_check
        %p636 = pneg %p635
      $region58: #{_lambda_.3} parent=5 // pred_check_branch
        %638 = sbr.rel (%p636) target = $region60
      $region59: #{_lambda_.3} parent=5 // pred_region
        %s639 = ssub.s32 %s13, 2
      $region60: #{_lambda_.3} parent=5 // pred_fallthru
        _
    $region6: #{_lambda_.3} parent=1 // loop_footer
      %s17 = sadd.s32 1, %s13
    $region7: #{_lambda_.3} parent=1 // loop_footer_branch
      %12 = sbr.rel target = $region3
    $region8: #{_lambda_.3} parent=1 // loop_exit
      _
    %640 = vsyncpa [#allocation3], 1
    %s641 = scalar_lea.sflag [#allocation3], 1
    %642 = vsyncpa %s641, 1

</llo_original>
